<compile_context>
chip_gen: v6e
topology: v6e:2x2x1
jax: 0.10.0
libtpu: 0.0.40
codegen_flags: <defaults>
</compile_context>

<pallas_src>
import functools

import jax
import jax.numpy as jnp
from jax import lax
from jax.experimental import pallas as pl
from jax.experimental.pallas import tpu as pltpu


_LANE = 128
# Per-grid-step VMEM budget for the streamed blocks (double-buffered in + out).
_VMEM_BLOCK_BUDGET = 6 * 1024 * 1024


def _mean_shift_kernel(w_ref, b_ref, x_ref, o_ref, *, identity):
    """1x1 conv (per-pixel channel mix) + bias, pure VPU.

       w_ref: (Cout, Cin) f32 in SMEM
       b_ref: (Cout,)     f32 in SMEM
       x_ref: (nb, Cin,  rows, lanes) in VMEM (sublane/lane-dense slabs)
       o_ref: (nb, Cout, rows, lanes) in VMEM
    """
    nb, cin = x_ref.shape[0], x_ref.shape[1]
    cout = o_ref.shape[1]
    for n in range(nb):                       # nb == 1 except for tiny inputs
        if identity:
            # MeanShift fast path: identity weights -> y[c] = x[c] + b[c].
            for c in range(cout):
                o_ref[n, c] = (x_ref[n, c].astype(jnp.float32)
                               + b_ref[c]).astype(o_ref.dtype)
        else:
            # Hoist the Cin channel loads out of the Cout loop (3 loads, not 9).
            xs = [x_ref[n, k].astype(jnp.float32) for k in range(cin)]
            for c in range(cout):
                acc = xs[0] * w_ref[c, 0]
                for k in range(1, cin):
                    acc = acc + xs[k] * w_ref[c, k]
                o_ref[n, c] = (acc + b_ref[c]).astype(o_ref.dtype)


def mean_shift_forward(x_nchw, weight_oihw, bias, *, identity_weight=False):
    """Forward of MeanShift: Conv2d(3, 3, 1, 1, 0) applied to NCHW input."""
    N, C, H, W = x_nchw.shape
    Cout = weight_oihw.shape[0]
    HW = H * W

    out_dtype = x_nchw.dtype
    if not jnp.issubdtype(out_dtype, jnp.floating):
        x_nchw = x_nchw.astype(jnp.float32)       # avoid silent int truncation
        out_dtype = jnp.float32

    w2d = weight_oihw.reshape(Cout, C).astype(jnp.float32)   # (O, I, 1, 1) -> (O, I)
    b1d = bias.astype(jnp.float32)

    # Pack sublanes: (N, C, HW) -> (N, C, HW//128, 128) (metadata-only reshape).
    # If HW isn't lane-aligned, fall back to one (1, HW) row per channel
    # (still correct; stores are masked).
    if HW % _LANE == 0:
        rows, lanes = HW // _LANE, _LANE
    else:
        rows, lanes = 1, HW
        # TODO(synk): lane-tile non-128-multiple HW for very large odd images.
    x_in = x_nchw.reshape(N, C, rows, lanes)

    itemsize = max(jnp.dtype(out_dtype).itemsize, 4)          # f32 accumulate
    bytes_per_row = 2 * (C + Cout) * lanes * itemsize         # 2x = double buffer
    row_budget = max(8, (_VMEM_BLOCK_BUDGET // bytes_per_row) // 8 * 8)
    if rows <= row_budget:
        row_tile = rows              # block == full dim (no (8,128) constraint)
    else:
        row_tile = row_budget        # multiple of 8; lanes multiple of 128
    num_row_tiles = pl.cdiv(rows, row_tile)

    # Tiny problems: collapse the batch axis into one grid step so the
    # fixed per-step pipeline overhead is paid once.
    tiny = N * (C + Cout) * HW * itemsize * 2 <= 2 * 1024 * 1024
    n_tile = N if (tiny and num_row_tiles == 1) else 1
    grid = (N // n_tile, num_row_tiles)

    out = pl.pallas_call(
        functools.partial(_mean_shift_kernel, identity=identity_weight),
        out_shape=jax.ShapeDtypeStruct((N, Cout, rows, lanes), out_dtype),
        grid_spec=pltpu.PrefetchScalarGridSpec(
            num_scalar_prefetch=0,
            grid=grid,
            in_specs=[
                pl.BlockSpec(memory_space=pltpu.MemorySpace.SMEM),   # weights
                pl.BlockSpec(memory_space=pltpu.MemorySpace.SMEM),   # bias
                pl.BlockSpec((n_tile, C, row_tile, lanes),
                             lambda n, r: (n, 0, r, 0)),
            ],
            out_specs=pl.BlockSpec((n_tile, Cout, row_tile, lanes),
                                   lambda n, r: (n, 0, r, 0)),
        ),
        compiler_params=pltpu.CompilerParams(
            # Both axes independent: v7x's two TensorCores can split either the
            # batch or the spatial tiles (covers N == 1 inference).
            dimension_semantics=("parallel", "parallel"),
        ),
    )(w2d, b1d, x_in)
    return out.reshape(N, Cout, H, W)


def make_mean_shift_params(mean_rgb, sub):
    """Matches MeanShift.__init__: identity 1x1 weights, bias = sign * mean_rgb."""
    sign = -1.0 if sub else 1.0
    weight = jnp.eye(3, dtype=jnp.float32).reshape(3, 3, 1, 1)   # (O, I, 1, 1)
    bias = sign * jnp.asarray(mean_rgb, dtype=jnp.float32)
    return weight, bias


def _reference_forward(x_nchw, weight_oihw, bias):
    """Pure-JAX reference (lax.conv) for correctness checking."""
    y = lax.conv_general_dilated(
        x_nchw, weight_oihw, window_strides=(1, 1), padding=((0, 0), (0, 0)),
        dimension_numbers=("NCHW", "OIHW", "NCHW"),
    )
    return y + bias[None, :, None, None]


if __name__ == "__main__":
    key = jax.random.PRNGKey(0)
    mean_rgb = (0.4488, 0.4371, 0.4040)          # typical DIV2K RGB mean
    weight, bias = make_mean_shift_params(mean_rgb, sub=True)

    # Small lane-aligned shape (HW = 256 = 2 * 128).
    N, C, H, W = 2, 3, 16, 16                    # MeanShift is RGB -> 3 channels
    x = jax.random.normal(key, (N, C, H, W), jnp.float32)
    ref = jax.block_until_ready(_reference_forward(x, weight, bias))

    out_fast = jax.block_until_ready(
        mean_shift_forward(x, weight, bias, identity_weight=True))
    out_gen = jax.block_until_ready(
        mean_shift_forward(x, weight, bias, identity_weight=False))

    assert out_fast.shape == (N, C, H, W), out_fast.shape
    assert jnp.allclose(out_fast, ref, atol=1e-5, rtol=1e-5), "fast path mismatch"
    assert jnp.allclose(out_gen, ref, atol=1e-5, rtol=1e-5), "general path mismatch"

    # Non-lane-aligned fallback path (HW = 225, not a multiple of 128).
    x2 = jax.random.normal(jax.random.PRNGKey(1), (1, 3, 15, 15), jnp.float32)
    out2 = jax.block_until_ready(
        mean_shift_forward(x2, weight, bias, identity_weight=True))
    ref2 = jax.block_until_ready(_reference_forward(x2, weight, bias))
    assert jnp.allclose(out2, ref2, atol=1e-5, rtol=1e-5), "fallback path mismatch"

    print("KERNEL_OK")
</pallas_src>

<mosaic_0001>
module attributes {stable_mosaic.version = 11 : i64} {
  func.func @_mean_shift_kernel(%arg0: i32, %arg1: i32, %arg2: memref<3x3xf32, #tpu.memory_space<smem>>, %arg3: memref<3xf32, #tpu.memory_space<smem>>, %arg4: memref<2x3x2x128xf32, #tpu.memory_space<vmem>>, %arg5: memref<2x3x2x128xf32, #tpu.memory_space<vmem>>) attributes {dimension_semantics = [#tpu.dimension_semantics<parallel>, #tpu.dimension_semantics<parallel>], iteration_bounds = array<i64: 1, 1>, scalar_prefetch = 0 : i64, scratch_operands = 0 : i64, tpu.core_type = #tpu.core_type<tc>, window_params = [{transform_indices = @transform_0, window_bounds = array<i64: 3, 3>}, {transform_indices = @transform_1, window_bounds = array<i64: 3>}, {transform_indices = @transform_2, window_bounds = array<i64: 2, 3, 2, 128>}, {transform_indices = @transform_3, window_bounds = array<i64: 2, 3, 2, 128>}]} {
    %c0 = arith.constant 0 : index
    %c0_0 = arith.constant 0 : index
    %c0_1 = arith.constant 0 : index
    %c0_2 = arith.constant 0 : index
    %0 = vector.load %arg4[%c0, %c0_0, %c0_1, %c0_2] : memref<2x3x2x128xf32, #tpu.memory_space<vmem>>, vector<1x1x2x128xf32>
    %1 = vector.shape_cast %0 : vector<1x1x2x128xf32> to vector<2x128xf32>
    %c0_3 = arith.constant 0 : index
    %2 = memref.load %arg3[%c0_3] : memref<3xf32, #tpu.memory_space<smem>>
    %3 = vector.broadcast %2 : f32 to vector<2x128xf32>
    %4 = arith.addf %1, %3 : vector<2x128xf32>
    %c0_4 = arith.constant 0 : index
    %c0_5 = arith.constant 0 : index
    %c0_6 = arith.constant 0 : index
    %c0_7 = arith.constant 0 : index
    %5 = vector.load %arg5[%c0_4, %c0_5, %c0_6, %c0_7] : memref<2x3x2x128xf32, #tpu.memory_space<vmem>>, vector<1x1x2x128xf32>
    %6 = vector.shape_cast %5 : vector<1x1x2x128xf32> to vector<2x128xf32>
    %7 = vector.shape_cast %4 : vector<2x128xf32> to vector<1x1x2x128xf32>
    tpu.vector_store %arg5[%c0_4, %c0_5, %c0_6, %c0_7], %7 {strides = array<i32>} : memref<2x3x2x128xf32, #tpu.memory_space<vmem>>, vector<1x1x2x128xf32>,
    %c0_8 = arith.constant 0 : index
    %c1 = arith.constant 1 : index
    %c0_9 = arith.constant 0 : index
    %c0_10 = arith.constant 0 : index
    %8 = vector.load %arg4[%c0_8, %c1, %c0_9, %c0_10] : memref<2x3x2x128xf32, #tpu.memory_space<vmem>>, vector<1x1x2x128xf32>
    %9 = vector.shape_cast %8 : vector<1x1x2x128xf32> to vector<2x128xf32>
    %c1_11 = arith.constant 1 : index
    %10 = memref.load %arg3[%c1_11] : memref<3xf32, #tpu.memory_space<smem>>
    %11 = vector.broadcast %10 : f32 to vector<2x128xf32>
    %12 = arith.addf %9, %11 : vector<2x128xf32>
    %c0_12 = arith.constant 0 : index
    %c1_13 = arith.constant 1 : index
    %c0_14 = arith.constant 0 : index
    %c0_15 = arith.constant 0 : index
    %13 = vector.load %arg5[%c0_12, %c1_13, %c0_14, %c0_15] : memref<2x3x2x128xf32, #tpu.memory_space<vmem>>, vector<1x1x2x128xf32>
    %14 = vector.shape_cast %13 : vector<1x1x2x128xf32> to vector<2x128xf32>
    %15 = vector.shape_cast %12 : vector<2x128xf32> to vector<1x1x2x128xf32>
    tpu.vector_store %arg5[%c0_12, %c1_13, %c0_14, %c0_15], %15 {strides = array<i32>} : memref<2x3x2x128xf32, #tpu.memory_space<vmem>>, vector<1x1x2x128xf32>,
    %c0_16 = arith.constant 0 : index
    %c2 = arith.constant 2 : index
    %c0_17 = arith.constant 0 : index
    %c0_18 = arith.constant 0 : index
    %16 = vector.load %arg4[%c0_16, %c2, %c0_17, %c0_18] : memref<2x3x2x128xf32, #tpu.memory_space<vmem>>, vector<1x1x2x128xf32>
    %17 = vector.shape_cast %16 : vector<1x1x2x128xf32> to vector<2x128xf32>
    %c2_19 = arith.constant 2 : index
    %18 = memref.load %arg3[%c2_19] : memref<3xf32, #tpu.memory_space<smem>>
    %19 = vector.broadcast %18 : f32 to vector<2x128xf32>
    %20 = arith.addf %17, %19 : vector<2x128xf32>
    %c0_20 = arith.constant 0 : index
    %c2_21 = arith.constant 2 : index
    %c0_22 = arith.constant 0 : index
    %c0_23 = arith.constant 0 : index
    %21 = vector.load %arg5[%c0_20, %c2_21, %c0_22, %c0_23] : memref<2x3x2x128xf32, #tpu.memory_space<vmem>>, vector<1x1x2x128xf32>
    %22 = vector.shape_cast %21 : vector<1x1x2x128xf32> to vector<2x128xf32>
    %23 = vector.shape_cast %20 : vector<2x128xf32> to vector<1x1x2x128xf32>
    tpu.vector_store %arg5[%c0_20, %c2_21, %c0_22, %c0_23], %23 {strides = array<i32>} : memref<2x3x2x128xf32, #tpu.memory_space<vmem>>, vector<1x1x2x128xf32>,
    %c1_24 = arith.constant 1 : index
    %c0_25 = arith.constant 0 : index
    %c0_26 = arith.constant 0 : index
    %c0_27 = arith.constant 0 : index
    %24 = vector.load %arg4[%c1_24, %c0_25, %c0_26, %c0_27] : memref<2x3x2x128xf32, #tpu.memory_space<vmem>>, vector<1x1x2x128xf32>
    %25 = vector.shape_cast %24 : vector<1x1x2x128xf32> to vector<2x128xf32>
    %c0_28 = arith.constant 0 : index
    %26 = memref.load %arg3[%c0_28] : memref<3xf32, #tpu.memory_space<smem>>
    %27 = vector.broadcast %26 : f32 to vector<2x128xf32>
    %28 = arith.addf %25, %27 : vector<2x128xf32>
    %c1_29 = arith.constant 1 : index
    %c0_30 = arith.constant 0 : index
    %c0_31 = arith.constant 0 : index
    %c0_32 = arith.constant 0 : index
    %29 = vector.load %arg5[%c1_29, %c0_30, %c0_31, %c0_32] : memref<2x3x2x128xf32, #tpu.memory_space<vmem>>, vector<1x1x2x128xf32>
    %30 = vector.shape_cast %29 : vector<1x1x2x128xf32> to vector<2x128xf32>
    %31 = vector.shape_cast %28 : vector<2x128xf32> to vector<1x1x2x128xf32>
    tpu.vector_store %arg5[%c1_29, %c0_30, %c0_31, %c0_32], %31 {strides = array<i32>} : memref<2x3x2x128xf32, #tpu.memory_space<vmem>>, vector<1x1x2x128xf32>,
    %c1_33 = arith.constant 1 : index
    %c1_34 = arith.constant 1 : index
    %c0_35 = arith.constant 0 : index
    %c0_36 = arith.constant 0 : index
    %32 = vector.load %arg4[%c1_33, %c1_34, %c0_35, %c0_36] : memref<2x3x2x128xf32, #tpu.memory_space<vmem>>, vector<1x1x2x128xf32>
    %33 = vector.shape_cast %32 : vector<1x1x2x128xf32> to vector<2x128xf32>
    %c1_37 = arith.constant 1 : index
    %34 = memref.load %arg3[%c1_37] : memref<3xf32, #tpu.memory_space<smem>>
    %35 = vector.broadcast %34 : f32 to vector<2x128xf32>
    %36 = arith.addf %33, %35 : vector<2x128xf32>
    %c1_38 = arith.constant 1 : index
    %c1_39 = arith.constant 1 : index
    %c0_40 = arith.constant 0 : index
    %c0_41 = arith.constant 0 : index
    %37 = vector.load %arg5[%c1_38, %c1_39, %c0_40, %c0_41] : memref<2x3x2x128xf32, #tpu.memory_space<vmem>>, vector<1x1x2x128xf32>
    %38 = vector.shape_cast %37 : vector<1x1x2x128xf32> to vector<2x128xf32>
    %39 = vector.shape_cast %36 : vector<2x128xf32> to vector<1x1x2x128xf32>
    tpu.vector_store %arg5[%c1_38, %c1_39, %c0_40, %c0_41], %39 {strides = array<i32>} : memref<2x3x2x128xf32, #tpu.memory_space<vmem>>, vector<1x1x2x128xf32>,
    %c1_42 = arith.constant 1 : index
    %c2_43 = arith.constant 2 : index
    %c0_44 = arith.constant 0 : index
    %c0_45 = arith.constant 0 : index
    %40 = vector.load %arg4[%c1_42, %c2_43, %c0_44, %c0_45] : memref<2x3x2x128xf32, #tpu.memory_space<vmem>>, vector<1x1x2x128xf32>
    %41 = vector.shape_cast %40 : vector<1x1x2x128xf32> to vector<2x128xf32>
    %c2_46 = arith.constant 2 : index
    %42 = memref.load %arg3[%c2_46] : memref<3xf32, #tpu.memory_space<smem>>
    %43 = vector.broadcast %42 : f32 to vector<2x128xf32>
    %44 = arith.addf %41, %43 : vector<2x128xf32>
    %c1_47 = arith.constant 1 : index
    %c2_48 = arith.constant 2 : index
    %c0_49 = arith.constant 0 : index
    %c0_50 = arith.constant 0 : index
    %45 = vector.load %arg5[%c1_47, %c2_48, %c0_49, %c0_50] : memref<2x3x2x128xf32, #tpu.memory_space<vmem>>, vector<1x1x2x128xf32>
    %46 = vector.shape_cast %45 : vector<1x1x2x128xf32> to vector<2x128xf32>
    %47 = vector.shape_cast %44 : vector<2x128xf32> to vector<1x1x2x128xf32>
    tpu.vector_store %arg5[%c1_47, %c2_48, %c0_49, %c0_50], %47 {strides = array<i32>} : memref<2x3x2x128xf32, #tpu.memory_space<vmem>>, vector<1x1x2x128xf32>,
    return
  }
  func.func @transform_0(%arg0: i32, %arg1: i32) -> (i32, i32) {
    %c0_i32 = arith.constant 0 : i32
    %c0_i32_0 = arith.constant 0 : i32
    %c0_i32_1 = arith.constant 0 : i32
    return %c0_i32, %c0_i32_0 : i32, i32
  }
  func.func @transform_1(%arg0: i32, %arg1: i32) -> i32 {
    %c0_i32 = arith.constant 0 : i32
    %c0_i32_0 = arith.constant 0 : i32
    return %c0_i32 : i32
  }
  func.func @transform_2(%arg0: i32, %arg1: i32) -> (i32, i32, i32, i32) {
    %c0_i32 = arith.constant 0 : i32
    %c0_i32_0 = arith.constant 0 : i32
    %c0_i32_1 = arith.constant 0 : i32
    return %arg0, %c0_i32, %arg1, %c0_i32_0 : i32, i32, i32, i32
  }
  func.func @transform_3(%arg0: i32, %arg1: i32) -> (i32, i32, i32, i32) {
    %c0_i32 = arith.constant 0 : i32
    %c0_i32_0 = arith.constant 0 : i32
    %c0_i32_1 = arith.constant 0 : i32
    return %arg0, %c0_i32, %arg1, %c0_i32_0 : i32, i32, i32, i32
  }
}

</mosaic_0001>

<llo_original>
// kernel: tpu_custom_call.1
$region0: #{tpu_custom_call.1}
  #allocation0 [shape = 'u32[]', space=smem, size = 0x4, offset = 0x4, fixed_abs, tag = 'smem constant byte address 0x4 - core index']
  #allocation1 [shape = 'u32[144,128]{1,0:T(1,128)}', space=vmem, size = 0x12000, scoped, tag = 'internal scratch']
  %s0 = inlined_call_operand.hbm [shape: f32[3,3], index: 0, kind: input, shape index: {}]
  %s1 = inlined_call_operand.vmem [shape: f32[3], index: 1, kind: input, shape index: {}]
  %s2 = inlined_call_operand.hbm [shape: f32[2,3,2,128], index: 2, kind: input, shape index: {}]
  %s3 = inlined_call_operand.hbm [shape: f32[2,3,2,128], index: 3, kind: output, shape index: {}]
  %s4 = sld [smem:[#allocation0]]
  $region34: #{tpu_custom_call.1} parent=0
    _
  %s6 = ssub.s32 1, %s4
  %s7 = scalar_select 0, %s6, %s4
  $region1: #{tpu_custom_call.1} parent=0
    #allocation2 [shape = 'u8[2048]{0}', space=smem, size = 0x800, scoped, tag = 'input window, operand 0, single buffered']
    #allocation3 [shape = 's32[1]{0}', space=sflag, size = 0x4, scoped, tag = 'scoped memory for tpu_custom_call.1']
    #allocation4 [shape = 's32[1]{0}', space=sflag, size = 0x4, scoped, tag = 'scoped memory for tpu_custom_call.1']
    #allocation5 [shape = 's32[1]{0}', space=sflag, size = 0x4, scoped, tag = 'scoped memory for tpu_custom_call.1']
    #allocation6 [shape = 's32[1]{0}', space=sflag, size = 0x4, scoped, tag = 'scoped memory for tpu_custom_call.1']
    #allocation7 [shape = 'u8[512]{0}', space=smem, size = 0x200, scoped, tag = 'input window, operand 1, single buffered']
    #allocation8 [shape = 'u8[6144]{0}', space=vmem, size = 0x1800, scoped, tag = 'input window, operand 2, single buffered']
    #allocation9 [shape = 'u8[6144]{0}', space=vmem, size = 0x1800, scoped, tag = 'output window, operand 0, single buffered']
    %8 = vsyncpa [#allocation5], 0
    %9 = vsyncpa [#allocation6], 0
    %10 = vsyncpa [#allocation3], 0
    %11 = vsyncpa [#allocation4], 0
    // Predicated region
    $region2: #{tpu_custom_call.1} parent=1 // pred_check
      _
    $region3: #{tpu_custom_call.1} parent=1 // pred_check_branch
      %13 = sbr.rel (0) target = $region5
    $region4: #{tpu_custom_call.1} parent=1 // pred_region
      %s15 = ssub.s32 64, 64
      %16 = vsyncadd [#allocation5], %s15
      %19 = dma.hbm_to_smem %s0, 64, [#allocation2], [#allocation5]
    $region5: #{tpu_custom_call.1} parent=1 // pred_fallthru
      _
    // Predicated region
    $region6: #{tpu_custom_call.1} parent=1 // pred_check
      _
    $region7: #{tpu_custom_call.1} parent=1 // pred_check_branch
      %21 = sbr.rel (0) target = $region9
    $region8: #{tpu_custom_call.1} parent=1 // pred_region
      %s23 = ssub.s32 16, 16
      %24 = vsyncadd [#allocation6], %s23
      %s26 = sshll.u32 %s1, 4
      %s27 = int_to_ptr.vmem [resolvable:$true] %s26
      %29 = dma.vmem_to_smem %s27, 16, [#allocation7], [#allocation6]
    $region9: #{tpu_custom_call.1} parent=1 // pred_fallthru
      _
    // Predicated region
    $region10: #{tpu_custom_call.1} parent=1 // pred_check
      _
    $region11: #{tpu_custom_call.1} parent=1 // pred_check_branch
      %31 = sbr.rel (0) target = $region13
    $region12: #{tpu_custom_call.1} parent=1 // pred_region
      %s33 = ssub.s32 192, 192
      %34 = vsyncadd [#allocation3], %s33
      %s35 = sshll.u32 [#allocation8], 4
      %s36 = int_to_ptr.vmem [resolvable:$true] %s35
      %41 = dma.hbm_to_vmem [thread:$0]  %s2, 192, %s36, [#allocation3], 32, 32, 2
    $region13: #{tpu_custom_call.1} parent=1 // pred_fallthru
      _
    // Predicated region
    $region14: #{tpu_custom_call.1} parent=1 // pred_check
      _
    $region15: #{tpu_custom_call.1} parent=1 // pred_check_branch
      %43 = sbr.rel (0) target = $region17
    $region16: #{tpu_custom_call.1} parent=1 // pred_region
      %44 = dma.done [#allocation5], 64
    $region17: #{tpu_custom_call.1} parent=1 // pred_fallthru
      _
    // Predicated region
    $region18: #{tpu_custom_call.1} parent=1 // pred_check
      _
    $region19: #{tpu_custom_call.1} parent=1 // pred_check_branch
      %46 = sbr.rel (0) target = $region21
    $region20: #{tpu_custom_call.1} parent=1 // pred_region
      %47 = dma.done [#allocation6], 16
    $region21: #{tpu_custom_call.1} parent=1 // pred_fallthru
      _
    // Predicated region
    $region22: #{tpu_custom_call.1} parent=1 // pred_check
      _
    $region23: #{tpu_custom_call.1} parent=1 // pred_check_branch
      %49 = sbr.rel (0) target = $region25
    $region24: #{tpu_custom_call.1} parent=1 // pred_region
      %50 = dma.done [#allocation3], 192
    $region25: #{tpu_custom_call.1} parent=1 // pred_fallthru
      _
    %51 = sfence
    %v52 = vld [vmem:[#allocation8] sm:$0x3]
    %s53 = sld [smem:[#allocation7]]
    %v54 = vstv %s53
    %v55 = vadd.f32 %v52, %v54
    %56 = vst [vmem:[#allocation9] sm:$0x3] %v55
    %s57 = scalar_lea.vmem [#allocation8], 2
    %v58 = vld [vmem:[%s57] sm:$0x3]
    %s59 = sld [smem:[#allocation7 + $0x1]]
    %v60 = vstv %s59
    %v61 = vadd.f32 %v58, %v60
    %s62 = scalar_lea.vmem [#allocation9], 2
    %63 = vst [vmem:[%s62] sm:$0x3] %v61
    %s64 = scalar_lea.vmem [#allocation8], 4
    %v65 = vld [vmem:[%s64] sm:$0x3]
    %s66 = sld [smem:[#allocation7 + $0x2]]
    %v67 = vstv %s66
    %v68 = vadd.f32 %v65, %v67
    %s69 = scalar_lea.vmem [#allocation9], 4
    %70 = vst [vmem:[%s69] sm:$0x3] %v68
    %s71 = scalar_lea.vmem [#allocation8], 6
    %v72 = vld [vmem:[%s71] sm:$0x3]
    %s73 = sld [smem:[#allocation7]]
    %v74 = vstv %s73
    %v75 = vadd.f32 %v72, %v74
    %s76 = scalar_lea.vmem [#allocation9], 6
    %77 = vst [vmem:[%s76] sm:$0x3] %v75
    %s78 = scalar_lea.vmem [#allocation8], 8
    %v79 = vld [vmem:[%s78] sm:$0x3]
    %s80 = sld [smem:[#allocation7 + $0x1]]
    %v81 = vstv %s80
    %v82 = vadd.f32 %v79, %v81
    %s83 = scalar_lea.vmem [#allocation9], 8
    %84 = vst [vmem:[%s83] sm:$0x3] %v82
    %s85 = scalar_lea.vmem [#allocation8], 10
    %v86 = vld [vmem:[%s85] sm:$0x3]
    %s87 = sld [smem:[#allocation7 + $0x2]]
    %v88 = vstv %s87
    %v89 = vadd.f32 %v86, %v88
    %s90 = scalar_lea.vmem [#allocation9], 10
    %91 = vst [vmem:[%s90] sm:$0x3] %v89
    // Predicated region
    $region26: #{tpu_custom_call.1} parent=1 // pred_check
      _
    $region27: #{tpu_custom_call.1} parent=1 // pred_check_branch
      %93 = sbr.rel (0) target = $region29
    $region28: #{tpu_custom_call.1} parent=1 // pred_region
      %s95 = ssub.s32 192, 192
      %96 = vsyncadd [#allocation4], %s95
      %s97 = sshll.u32 [#allocation9], 4
      %s98 = int_to_ptr.vmem [resolvable:$true] %s97
      %103 = dma.vmem_to_hbm [thread:$0]  %s98, 192, %s3, [#allocation4], 32, 32, 2
    $region29: #{tpu_custom_call.1} parent=1 // pred_fallthru
      _
    // Predicated region
    $region30: #{tpu_custom_call.1} parent=1 // pred_check
      _
    $region31: #{tpu_custom_call.1} parent=1 // pred_check_branch
      %105 = sbr.rel (0) target = $region33
    $region32: #{tpu_custom_call.1} parent=1 // pred_region
      %106 = dma.done [#allocation4], 192
    $region33: #{tpu_custom_call.1} parent=1 // pred_fallthru
      _
    %107 = vsyncpa [#allocation3], 1
    %108 = vsyncpa [#allocation4], 1
    %109 = vsyncpa [#allocation5], 1
    %110 = vsyncpa [#allocation6], 1

</llo_original>
